<compile_context>
chip_gen: v6e
topology: v6e:2x2x1
jax: 0.10.0
libtpu: 0.0.40
codegen_flags: <defaults>
</compile_context>

<pallas_src>
import jax
import jax.numpy as jnp
from jax.experimental import pallas as pl
from jax.experimental.pallas import tpu as pltpu


def _make_vpu_kernel(c_in, c_out):
    """Unrolled VPU path for small channel counts (avoids tiny-K/N MXU matmuls)."""

    def kernel(x_ref, w_ref, b_ref, o_ref):
        # x_ref: (c_in, T) VMEM, w_ref: (c_out, c_in) VMEM, b_ref: (c_out, 1) VMEM
        # o_ref: (c_out, T) VMEM
        t = o_ref.shape[-1]
        w = w_ref[...].astype(jnp.float32)                       # (c_out, c_in)
        acc = jnp.zeros((c_out, t), jnp.float32)
        for ci in range(c_in):
            # Sublane-broadcast input row ci across all c_out output rows (dense
            # tile), lane-broadcast the weight column -> pure dense VALU FMAs.
            row = jnp.broadcast_to(x_ref[ci:ci + 1, :], (c_out, t)).astype(jnp.float32)
            acc = acc + w[:, ci:ci + 1] * row
        o_ref[...] = (acc + b_ref[...].astype(jnp.float32)).astype(o_ref.dtype)

    return kernel


def _mxu_kernel(x_ref, w_ref, b_ref, o_ref):
    # General path: (C_out, C_in) @ (C_in, T) on the MXU with f32 accumulation.
    acc = jnp.dot(w_ref[...], x_ref[...], preferred_element_type=jnp.float32)
    o_ref[...] = (acc + b_ref[...]).astype(o_ref.dtype)


def _choose_spatial_tile(hw, c_in, c_out, n_batch, itemsize=4):
    """Lane-axis tile: as large as a conservative VMEM budget allows (multiple of
    128 when tiling), while keeping >=2 total grid blocks for megacore sharding."""
    vmem_budget = 8 * 1024 * 1024          # double-buffered in+out blocks; safe on v5e/v6e/v7x
    per_col = 2 * (c_in + c_out) * itemsize
    cap = max(128, min(16384, (vmem_budget // per_col) // 128 * 128))
    tile = hw if hw <= cap else cap
    if n_batch * pl.cdiv(hw, tile) < 2 and hw >= 256:
        # Split the spatial axis so both TensorCores (v7x) have work.
        tile = ((hw + 1) // 2 + 127) // 128 * 128
    return tile


def pointwise_conv2d(x_nchw, weight, bias):
    """1x1 conv, stride 1, no padding, groups=1.

    x_nchw: (N, C_in, H, W)
    weight: (C_out, C_in)   (squeezed from (C_out, C_in, 1, 1))
    bias:   (C_out,)
    returns (N, C_out, H, W)
    """
    N, C_in, H, W = x_nchw.shape
    C_out = weight.shape[0]
    HW = H * W

    # Free, contiguous views: spatial on the lane axis, no transposes.
    x3 = x_nchw.reshape(N, C_in, HW)
    w2 = weight.reshape(C_out, C_in)
    b2 = bias.reshape(C_out, 1)

    itemsize = jnp.dtype(x_nchw.dtype).itemsize
    tile_t = _choose_spatial_tile(HW, C_in, C_out, N, itemsize=itemsize)
    grid = (N, pl.cdiv(HW, tile_t))

    small_channels = (C_in <= 16) and (C_out <= 64)
    kernel = _make_vpu_kernel(C_in, C_out) if small_channels else _mxu_kernel

    cost = pl.CostEstimate(
        flops=2 * N * HW * C_in * C_out,
        transcendentals=0,
        bytes_accessed=itemsize * N * HW * (C_in + C_out) + 4 * (C_out * C_in + C_out),
    )

    out3 = pl.pallas_call(
        kernel,
        out_shape=jax.ShapeDtypeStruct((N, C_out, HW), x_nchw.dtype),
        grid_spec=pltpu.PrefetchScalarGridSpec(
            num_scalar_prefetch=0,
            grid=grid,
            in_specs=[
                # Batch dim squeezed out of the kernel view; spatial tiled on lanes.
                pl.BlockSpec((None, C_in, tile_t), lambda n, j: (n, 0, j)),
                pl.BlockSpec((C_out, C_in), lambda n, j: (0, 0)),
                pl.BlockSpec((C_out, 1), lambda n, j: (0, 0)),
            ],
            out_specs=pl.BlockSpec((None, C_out, tile_t), lambda n, j: (n, 0, j)),
        ),
        compiler_params=pltpu.CompilerParams(
            dimension_semantics=("parallel", "parallel"),
        ),
        cost_estimate=cost,
    )(x3, w2, b2)

    return out3.reshape(N, C_out, H, W)


class HistAdjust:
    """JAX/Pallas port of Hist_adjust (1x1 Conv2d)."""

    def __init__(self, in_ch, out_ch, key):
        kw, kb = jax.random.split(key)
        # Deterministic init mimicking PyTorch Conv2d default:
        # kaiming-uniform with fan_in = in_ch * 1 * 1 -> bound = 1/sqrt(fan_in)
        bound = 1.0 / jnp.sqrt(jnp.asarray(in_ch, jnp.float32))
        self.weight = jax.random.uniform(
            kw, (out_ch, in_ch), jnp.float32, minval=-bound, maxval=bound
        )
        self.bias = jax.random.uniform(
            kb, (out_ch,), jnp.float32, minval=-bound, maxval=bound
        )

    def __call__(self, x_nchw):
        return pointwise_conv2d(x_nchw, self.weight, self.bias)


if __name__ == "__main__":
    key = jax.random.PRNGKey(0)
    k_x, k_p = jax.random.split(key)

    N, C_in, C_out, H, W = 2, 4, 8, 16, 16
    x = jax.random.normal(k_x, (N, C_in, H, W), jnp.float32)

    model = HistAdjust(C_in, C_out, k_p)
    out = model(x)
    out = jax.block_until_ready(out)

    # Reference check against plain-JAX pointwise conv.
    ref = jnp.einsum("nchw,oc->nohw", x, model.weight) + model.bias[None, :, None, None]
    assert out.shape == (N, C_out, H, W)
    assert jnp.allclose(out, ref, atol=1e-5), "mismatch vs reference"

    print("KERNEL_OK")
</pallas_src>

<mosaic_0001>
module attributes {stable_mosaic.version = 11 : i64} {
  func.func @kernel(%arg0: i32, %arg1: i32, %arg2: memref<1x4x256xf32, #tpu.memory_space<vmem>>, %arg3: memref<8x4xf32, #tpu.memory_space<vmem>>, %arg4: memref<8x1xf32, #tpu.memory_space<vmem>>, %arg5: memref<1x8x256xf32, #tpu.memory_space<vmem>>) attributes {dimension_semantics = [#tpu.dimension_semantics<parallel>, #tpu.dimension_semantics<parallel>], iteration_bounds = array<i64: 2, 1>, scalar_prefetch = 0 : i64, scratch_operands = 0 : i64, tpu.core_type = #tpu.core_type<tc>, window_params = [{transform_indices = @transform_0, window_bounds = array<i64: 1, 4, 256>}, {pipeline_mode = #tpu.pipeline_mode<synchronous>, transform_indices = @transform_1, window_bounds = array<i64: 8, 4>}, {pipeline_mode = #tpu.pipeline_mode<synchronous>, transform_indices = @transform_2, window_bounds = array<i64: 8, 1>}, {transform_indices = @transform_3, window_bounds = array<i64: 1, 8, 256>}]} {
    %c0 = arith.constant 0 : index
    %c0_0 = arith.constant 0 : index
    %0 = vector.load %arg3[%c0, %c0_0] : memref<8x4xf32, #tpu.memory_space<vmem>>, vector<8x4xf32>
    %cst = arith.constant 0.000000e+00 : f32
    %1 = vector.broadcast %cst : f32 to vector<8x256xf32>
    %c0_1 = arith.constant 0 : index
    %c0_2 = arith.constant 0 : index
    %c0_3 = arith.constant 0 : index
    %2 = vector.load %arg2[%c0_1, %c0_2, %c0_3] : memref<1x4x256xf32, #tpu.memory_space<vmem>>, vector<1x1x256xf32>
    %3 = vector.shape_cast %2 : vector<1x1x256xf32> to vector<1x256xf32>
    %4 = vector.shape_cast %3 : vector<1x256xf32> to vector<1x256xf32>
    %5 = vector.broadcast %4 : vector<1x256xf32> to vector<8x256xf32>
    %6 = vector.extract_strided_slice %0 {offsets = [0, 0], sizes = [8, 1], strides = [1, 1]} : vector<8x4xf32> to vector<8x1xf32>
    %7 = vector.broadcast %6 : vector<8x1xf32> to vector<8x256xf32>
    %8 = arith.mulf %7, %5 : vector<8x256xf32>
    %9 = arith.addf %1, %8 : vector<8x256xf32>
    %c0_4 = arith.constant 0 : index
    %c1 = arith.constant 1 : index
    %c0_5 = arith.constant 0 : index
    %10 = vector.load %arg2[%c0_4, %c1, %c0_5] : memref<1x4x256xf32, #tpu.memory_space<vmem>>, vector<1x1x256xf32>
    %11 = vector.shape_cast %10 : vector<1x1x256xf32> to vector<1x256xf32>
    %12 = vector.shape_cast %11 : vector<1x256xf32> to vector<1x256xf32>
    %13 = vector.broadcast %12 : vector<1x256xf32> to vector<8x256xf32>
    %14 = vector.extract_strided_slice %0 {offsets = [0, 1], sizes = [8, 1], strides = [1, 1]} : vector<8x4xf32> to vector<8x1xf32>
    %15 = vector.broadcast %14 : vector<8x1xf32> to vector<8x256xf32>
    %16 = arith.mulf %15, %13 : vector<8x256xf32>
    %17 = arith.addf %9, %16 : vector<8x256xf32>
    %c0_6 = arith.constant 0 : index
    %c2 = arith.constant 2 : index
    %c0_7 = arith.constant 0 : index
    %18 = vector.load %arg2[%c0_6, %c2, %c0_7] : memref<1x4x256xf32, #tpu.memory_space<vmem>>, vector<1x1x256xf32>
    %19 = vector.shape_cast %18 : vector<1x1x256xf32> to vector<1x256xf32>
    %20 = vector.shape_cast %19 : vector<1x256xf32> to vector<1x256xf32>
    %21 = vector.broadcast %20 : vector<1x256xf32> to vector<8x256xf32>
    %22 = vector.extract_strided_slice %0 {offsets = [0, 2], sizes = [8, 1], strides = [1, 1]} : vector<8x4xf32> to vector<8x1xf32>
    %23 = vector.broadcast %22 : vector<8x1xf32> to vector<8x256xf32>
    %24 = arith.mulf %23, %21 : vector<8x256xf32>
    %25 = arith.addf %17, %24 : vector<8x256xf32>
    %c0_8 = arith.constant 0 : index
    %c3 = arith.constant 3 : index
    %c0_9 = arith.constant 0 : index
    %26 = vector.load %arg2[%c0_8, %c3, %c0_9] : memref<1x4x256xf32, #tpu.memory_space<vmem>>, vector<1x1x256xf32>
    %27 = vector.shape_cast %26 : vector<1x1x256xf32> to vector<1x256xf32>
    %28 = vector.shape_cast %27 : vector<1x256xf32> to vector<1x256xf32>
    %29 = vector.broadcast %28 : vector<1x256xf32> to vector<8x256xf32>
    %30 = vector.extract_strided_slice %0 {offsets = [0, 3], sizes = [8, 1], strides = [1, 1]} : vector<8x4xf32> to vector<8x1xf32>
    %31 = vector.broadcast %30 : vector<8x1xf32> to vector<8x256xf32>
    %32 = arith.mulf %31, %29 : vector<8x256xf32>
    %33 = arith.addf %25, %32 : vector<8x256xf32>
    %c0_10 = arith.constant 0 : index
    %c0_11 = arith.constant 0 : index
    %34 = vector.load %arg4[%c0_10, %c0_11] : memref<8x1xf32, #tpu.memory_space<vmem>>, vector<8x1xf32>
    %35 = vector.broadcast %34 : vector<8x1xf32> to vector<8x256xf32>
    %36 = arith.addf %33, %35 : vector<8x256xf32>
    %c0_12 = arith.constant 0 : index
    %c0_13 = arith.constant 0 : index
    %c0_14 = arith.constant 0 : index
    %37 = vector.load %arg5[%c0_12, %c0_13, %c0_14] : memref<1x8x256xf32, #tpu.memory_space<vmem>>, vector<1x8x256xf32>
    %38 = vector.shape_cast %37 : vector<1x8x256xf32> to vector<8x256xf32>
    %39 = vector.shape_cast %36 : vector<8x256xf32> to vector<1x8x256xf32>
    tpu.vector_store %arg5[%c0_12, %c0_13, %c0_14], %39 {strides = array<i32>} : memref<1x8x256xf32, #tpu.memory_space<vmem>>, vector<1x8x256xf32>,
    return
  }
  func.func @transform_0(%arg0: i32, %arg1: i32) -> (i32, i32, i32) {
    %c0_i32 = arith.constant 0 : i32
    %c0_i32_0 = arith.constant 0 : i32
    return %arg0, %c0_i32, %arg1 : i32, i32, i32
  }
  func.func @transform_1(%arg0: i32, %arg1: i32) -> (i32, i32) {
    %c0_i32 = arith.constant 0 : i32
    %c0_i32_0 = arith.constant 0 : i32
    %c0_i32_1 = arith.constant 0 : i32
    return %c0_i32, %c0_i32_0 : i32, i32
  }
  func.func @transform_2(%arg0: i32, %arg1: i32) -> (i32, i32) {
    %c0_i32 = arith.constant 0 : i32
    %c0_i32_0 = arith.constant 0 : i32
    %c0_i32_1 = arith.constant 0 : i32
    return %c0_i32, %c0_i32_0 : i32, i32
  }
  func.func @transform_3(%arg0: i32, %arg1: i32) -> (i32, i32, i32) {
    %c0_i32 = arith.constant 0 : i32
    %c0_i32_0 = arith.constant 0 : i32
    return %arg0, %c0_i32, %arg1 : i32, i32, i32
  }
}

</mosaic_0001>

<llo_original>
// kernel: tpu_custom_call.1
$region0: #{tpu_custom_call.1}
  #allocation0 [shape = 'u32[]', space=smem, size = 0x4, offset = 0x4, fixed_abs, tag = 'smem constant byte address 0x4 - core index']
  #allocation1 [shape = 'u32[144,128]{1,0:T(1,128)}', space=vmem, size = 0x12000, scoped, tag = 'internal scratch']
  %s0 = inlined_call_operand.vmem [shape: f32[2,4,256], index: 0, kind: input, shape index: {}]
  %s1 = inlined_call_operand.vmem [shape: f32[8,4], index: 1, kind: input, shape index: {}]
  %s2 = inlined_call_operand.vmem [shape: f32[8,1], index: 2, kind: input, shape index: {}]
  %s3 = inlined_call_operand.hbm [shape: f32[2,8,256], index: 3, kind: output, shape index: {}]
  %s4 = sld [smem:[#allocation0]]
  $region45: #{tpu_custom_call.1} parent=0
    _
  %s6 = ssub.s32 1, %s4
  %s7 = scalar_select 0, %s6, %s4
  $region1: #{tpu_custom_call.1} parent=0
    #allocation2 [shape = 'u8[16384]{0}', space=vmem, size = 0x4000, scoped, tag = 'output window, operand 0']
    #allocation3 [shape = 's32[2]{0}', space=sflag, size = 0x8, scoped, tag = 'scoped memory for tpu_custom_call.1']
    %8 = vsyncpa [#allocation3], 0
    %s9 = scalar_lea.sflag [#allocation3], 1
    %10 = vsyncpa %s9, 0
    loop: start=0, step=1, limit=4
    $region2: #{tpu_custom_call.1} parent=1 // loop_pre_header
      _
    $region3: #{tpu_custom_call.1} parent=1 // loop_header
      %s12 = sphi 0, %s16
      %p13 = scmp.ge.s32.totalorder %s12, 4
      %s19 = sphi 0, %s31
      %s20 = sphi 0, %s27
      %s21 = sphi 0, %s19
      %s22 = sphi 0, %s20
      %s23 = sphi 0, %s21
      %s24 = sphi 0, %s22
      %s36 = sphi 0, %s38
      %s39 = sphi 0, %s36
      %s40 = sphi 0, %s39
      %s56 = sphi 0, %s40
      %s60 = sphi 0, %s60
      %s62 = sphi 0, %s60
      %s63 = sphi 0, %s62
      %s77 = sphi 0, %s63
      %s81 = sphi 0, %s81
      %s83 = sphi 0, %s81
      %s84 = sphi 0, %s83
      %s98 = sphi 0, %s84
      %s106 = sphi 0, %s108
      %s109 = sphi 0, %s106
      %s110 = sphi 0, %s109
      %s126 = sphi 0, %s110
    $region4: #{tpu_custom_call.1} parent=1 // loop_header_branch
      %15 = sbr.rel (%p13) target = $region8
    $region5: #{tpu_custom_call.1} parent=1 // loop_body
      %s17 = ssub.s32 %s12, 1
      %s18 = ssub.s32 %s12, 2
      %s25 = sadd.s32 1, %s20
      %p26 = scmp.ge.s32.totalorder %s25, 1
      %s27 = scalar_select %p26, 0, %s25
      %s28 = sadd.s32 1, %s19
      %s29 = scalar_select %p26, %s28, %s19
      %p30 = scmp.ge.s32.totalorder %s29, 2
      %s31 = scalar_select %p30, 0, %s29
      %s32 = ssub.s32 %s19, %s31
      %s33 = ssub.s32 %s20, %s27
      %s34 = sor.u32 %s32, %s33
      %p35 = scmp.eq.s32.totalorder %s34, 0
      %s37 = sadd.s32 %s36, 1
      %s38 = scalar_select %p35, %s36, %s37
      %p41 = pneg %p35
      %p42 = scmp.eq.s32.totalorder %s12, 1
      %p43 = por %p41, %p42
      %p44 = scmp.ne.s32.totalorder %s36, %s39
      %p45 = scmp.eq.s32.totalorder %s12, 0
      %p46 = por %p44, %p45
      %p47 = scmp.ne.s32.totalorder %s36, %s39
      %p48 = scmp.eq.s32.totalorder %s17, 1
      %p49 = por %p47, %p48
      %p50 = scmp.ne.s32.totalorder %s39, %s40
      %p51 = scmp.eq.s32.totalorder %s17, 0
      %p52 = por %p50, %p51
      %p53 = scmp.ne.s32.totalorder %s39, %s40
      %p54 = scmp.eq.s32.totalorder %s18, 1
      %p55 = por %p53, %p54
      %p57 = scmp.ne.s32.totalorder %s40, %s56
      %p58 = scmp.eq.s32.totalorder %s18, 0
      %p59 = por %p57, %p58
      %s61 = sadd.s32 %s60, 1
      %p64 = scmp.eq.s32.totalorder %s12, 1
      %p65 = scmp.ne.s32.totalorder %s60, %s62
      %p66 = scmp.eq.s32.totalorder %s12, 0
      %p67 = por %p65, %p66
      %p68 = scmp.ne.s32.totalorder %s60, %s62
      %p69 = scmp.eq.s32.totalorder %s17, 1
      %p70 = por %p68, %p69
      %p71 = scmp.ne.s32.totalorder %s62, %s63
      %p72 = scmp.eq.s32.totalorder %s17, 0
      %p73 = por %p71, %p72
      %p74 = scmp.ne.s32.totalorder %s62, %s63
      %p75 = scmp.eq.s32.totalorder %s18, 1
      %p76 = por %p74, %p75
      %p78 = scmp.ne.s32.totalorder %s63, %s77
      %p79 = scmp.eq.s32.totalorder %s18, 0
      %p80 = por %p78, %p79
      %s82 = sadd.s32 %s81, 1
      %p85 = scmp.eq.s32.totalorder %s12, 1
      %p86 = scmp.ne.s32.totalorder %s81, %s83
      %p87 = scmp.eq.s32.totalorder %s12, 0
      %p88 = por %p86, %p87
      %p89 = scmp.ne.s32.totalorder %s81, %s83
      %p90 = scmp.eq.s32.totalorder %s17, 1
      %p91 = por %p89, %p90
      %p92 = scmp.ne.s32.totalorder %s83, %s84
      %p93 = scmp.eq.s32.totalorder %s17, 0
      %p94 = por %p92, %p93
      %p95 = scmp.ne.s32.totalorder %s83, %s84
      %p96 = scmp.eq.s32.totalorder %s18, 1
      %p97 = por %p95, %p96
      %p99 = scmp.ne.s32.totalorder %s84, %s98
      %p100 = scmp.eq.s32.totalorder %s18, 0
      %p101 = por %p99, %p100
      %s102 = ssub.s32 %s19, %s31
      %s103 = ssub.s32 %s20, %s27
      %s104 = sor.u32 %s102, %s103
      %p105 = scmp.eq.s32.totalorder %s104, 0
      %s107 = sadd.s32 %s106, 1
      %s108 = scalar_select %p105, %s106, %s107
      %p111 = pneg %p105
      %p112 = scmp.eq.s32.totalorder %s12, 1
      %p113 = por %p111, %p112
      %p114 = scmp.ne.s32.totalorder %s106, %s109
      %p115 = scmp.eq.s32.totalorder %s12, 0
      %p116 = por %p114, %p115
      %p117 = scmp.ne.s32.totalorder %s106, %s109
      %p118 = scmp.eq.s32.totalorder %s17, 1
      %p119 = por %p117, %p118
      %p120 = scmp.ne.s32.totalorder %s109, %s110
      %p121 = scmp.eq.s32.totalorder %s17, 0
      %p122 = por %p120, %p121
      %p123 = scmp.ne.s32.totalorder %s109, %s110
      %p124 = scmp.eq.s32.totalorder %s18, 1
      %p125 = por %p123, %p124
      %p127 = scmp.ne.s32.totalorder %s110, %s126
      %p128 = scmp.eq.s32.totalorder %s18, 0
      %p129 = por %p127, %p128
      %p130 = scmp.le.s32.totalorder 1, %s12
      %p131 = scmp.lt.s32.totalorder %s12, 3
      %p132 = pnand %p130, %p131
      %p133 = pneg %p132
      // Predicated region
      $region9: #{tpu_custom_call.1} parent=5 // pred_check
        _
      $region10: #{tpu_custom_call.1} parent=5 // pred_check_branch
        %135 = sbr.rel (%p132) target = $region12
      $region11: #{tpu_custom_call.1} parent=5 // pred_region
        %s136 = ssub.s32 %s12, 1
        // Predicated region
        $region13: #{tpu_custom_call.1} parent=11 // pred_check
          %p137 = pneg %p73
        $region14: #{tpu_custom_call.1} parent=11 // pred_check_branch
          %139 = sbr.rel (%p137) target = $region16
        $region15: #{tpu_custom_call.1} parent=11 // pred_region
          _
        $region16: #{tpu_custom_call.1} parent=11 // pred_fallthru
          _
        // Predicated region
        $region17: #{tpu_custom_call.1} parent=11 // pred_check
          %p140 = pneg %p94
        $region18: #{tpu_custom_call.1} parent=11 // pred_check_branch
          %142 = sbr.rel (%p140) target = $region20
        $region19: #{tpu_custom_call.1} parent=11 // pred_region
          _
        $region20: #{tpu_custom_call.1} parent=11 // pred_fallthru
          _
      $region12: #{tpu_custom_call.1} parent=5 // pred_fallthru
        _
      %p143 = scmp.lt.s32.totalorder %s12, 2
      // Predicated region
      $region21: #{tpu_custom_call.1} parent=5 // pred_check
        %p144 = pneg %p143
      $region22: #{tpu_custom_call.1} parent=5 // pred_check_branch
        %146 = sbr.rel (%p144) target = $region24
      $region23: #{tpu_custom_call.1} parent=5 // pred_region
        // Predicated region
        $region25: #{tpu_custom_call.1} parent=23 // pred_check
          %p147 = pneg %p46
        $region26: #{tpu_custom_call.1} parent=23 // pred_check_branch
          %149 = sbr.rel (%p147) target = $region28
        $region27: #{tpu_custom_call.1} parent=23 // pred_region
          %s150 = smul.u32 2, %s20
          %p151 = scmp.lt.s32.totalorder %s19, 1
          %s152 = scalar_select %p151, %s19, 1
          %p153 = scmp.lt.s32.totalorder %s150, 1
          %s154 = scalar_select %p153, %s150, 1
          %s155 = smul.addr %s152, 2
          %s156 = sadd.s32 %s154, %s155
          %s157 = smul.addr %s156, 4
          %s158 = scalar_lea.vmem %s0, %s157
          %s159 = smul.u32 2, %s20
        $region28: #{tpu_custom_call.1} parent=23 // pred_fallthru
          _
      $region24: #{tpu_custom_call.1} parent=5 // pred_fallthru
        _
      %p160 = scmp.le.s32.totalorder 1, %s12
      %p161 = scmp.lt.s32.totalorder %s12, 3
      %p162 = pnand %p160, %p161
      %p163 = pneg %p162
      // Predicated region
      $region29: #{tpu_custom_call.1} parent=5 // pred_check
        _
      $region30: #{tpu_custom_call.1} parent=5 // pred_check_branch
        %165 = sbr.rel (%p162) target = $region32
      $region31: #{tpu_custom_call.1} parent=5 // pred_region
        %s166 = ssub.s32 %s12, 1
        %s167 = smul.u32 2, %s22
        %p168 = scmp.lt.s32.totalorder %s21, 1
        %s169 = scalar_select %p168, %s21, 1
        %p170 = scmp.lt.s32.totalorder %s167, 1
        %s171 = scalar_select %p170, %s167, 1
        %s172 = smul.addr %s169, 2
        %s173 = sadd.s32 %s171, %s172
        %s174 = smul.addr %s173, 4
        %s175 = scalar_lea.vmem %s0, %s174
        %p176 = pneg %p52
        %p177 = pneg %p49
        %p178 = pneg %p73
        %p179 = pneg %p70
        %p180 = pneg %p94
        %p181 = pneg %p91
        %p182 = pneg %p122
        %p183 = pneg %p119
        %s184 = sand.u32 %s109, 1
        %s185 = scalar_lea.sflag [#allocation3], %s184
        %s186 = sand.u32 %s109, 1
        %s187 = smul.addr %s186, 16
        %s188 = scalar_lea.vmem [#allocation2], %s187
        %s189 = smul.u32 2, %s22
        %p190 = scmp.lt.s32.totalorder %s21, 1
        %s191 = scalar_select %p190, %s21, 1
        %p192 = scmp.lt.s32.totalorder %s189, 1
        %s193 = scalar_select %p192, %s189, 1
        %s194 = smul.addr %s191, 2
        %s195 = sadd.s32 %s193, %s194
        %s196 = smul.addr %s195, 4
        %s197 = scalar_lea.vmem %s0, %s196
        %s198 = smul.u32 2, %s22
        %s199 = smul.u32 2, %s22
        %v200 = vld [vmem:[%s1] sm:$0xff]
        %v201 = vld [vmem:[%s197] ss:$4 sm:$0x3]
        %v203 = vlaneseq
        %v204 = vshrl.u32 %v203, 7
        %v205 = vsub.s32 0, %v204
        %v206 = vrot.slane %v201, %v205
        %v207 = vlaneseq
        %v208 = vshrl.u32 %v207, 7
        %v209 = vsub.s32 1, %v208
        %v210 = vrot.slane %v201, %v209
        %214 = vset.pattern.permute.xlu0 0
        %215 = vperm.xlu0 %214, %v200
        %v216 = vpop.permute.xlu0 %215
        %v218 = vmul.f32 %v216, %v206
        %v219 = vmul.f32 %v216, %v210
        %v220 = vadd.f32 %v218, 0.0
        %v221 = vadd.f32 %v219, 0.0
        %s222 = scalar_lea.vmem %s197, 1
        %v223 = vld [vmem:[%s222] ss:$4 sm:$0x3]
        %v225 = vlaneseq
        %v226 = vshrl.u32 %v225, 7
        %v227 = vsub.s32 0, %v226
        %v228 = vrot.slane %v223, %v227
        %v229 = vlaneseq
        %v230 = vshrl.u32 %v229, 7
        %v231 = vsub.s32 1, %v230
        %v232 = vrot.slane %v223, %v231
        %235 = vset.pattern.permute.xlu0 1
        %236 = vperm.xlu0 %235, %v200
        %v237 = vpop.permute.xlu0 %236
        %v239 = vmul.f32 %v237, %v228
        %v240 = vmul.f32 %v237, %v232
        %v241 = vadd.f32 %v220, %v239
        %v242 = vadd.f32 %v221, %v240
        %s243 = scalar_lea.vmem %s197, 2
        %v244 = vld [vmem:[%s243] ss:$4 sm:$0x3]
        %v246 = vlaneseq
        %v247 = vshrl.u32 %v246, 7
        %v248 = vsub.s32 0, %v247
        %v249 = vrot.slane %v244, %v248
        %v250 = vlaneseq
        %v251 = vshrl.u32 %v250, 7
        %v252 = vsub.s32 1, %v251
        %v253 = vrot.slane %v244, %v252
        %256 = vset.pattern.permute.xlu0 2
        %257 = vperm.xlu0 %256, %v200
        %v258 = vpop.permute.xlu0 %257
        %v260 = vmul.f32 %v258, %v249
        %v261 = vmul.f32 %v258, %v253
        %v262 = vadd.f32 %v241, %v260
        %v263 = vadd.f32 %v242, %v261
        %s264 = scalar_lea.vmem %s197, 3
        %v265 = vld [vmem:[%s264] ss:$4 sm:$0x3]
        %v267 = vlaneseq
        %v268 = vshrl.u32 %v267, 7
        %v269 = vsub.s32 0, %v268
        %v270 = vrot.slane %v265, %v269
        %v271 = vlaneseq
        %v272 = vshrl.u32 %v271, 7
        %v273 = vsub.s32 1, %v272
        %v274 = vrot.slane %v265, %v273
        %277 = vset.pattern.permute.xlu0 3
        %278 = vperm.xlu0 %277, %v200
        %v279 = vpop.permute.xlu0 %278
        %v281 = vmul.f32 %v279, %v270
        %v282 = vmul.f32 %v279, %v274
        %v283 = vadd.f32 %v262, %v281
        %v284 = vadd.f32 %v263, %v282
        %v285 = vld [vmem:[%s2] sm:$0xff]
        %287 = vset.pattern.permute.xlu0 0
        %288 = vperm.xlu0 %287, %v285
        %v289 = vpop.permute.xlu0 %288
        %v291 = vadd.f32 %v283, %v289
        %v292 = vadd.f32 %v284, %v289
        %293 = vst [vmem:[%s188] sm:$0xff] %v291
        %294 = vst [vmem:[%s188 + $0x8] sm:$0xff] %v292
        %s295 = sand.u32 %s109, 1
        %s296 = scalar_lea.sflag [#allocation3], %s295
        %s297 = sand.u32 %s109, 1
        %s298 = smul.addr %s297, 16
        %s299 = scalar_lea.vmem [#allocation2], %s298
        // Predicated region
        $region33: #{tpu_custom_call.1} parent=31 // pred_check
          %p300 = pneg %p119
        $region34: #{tpu_custom_call.1} parent=31 // pred_check_branch
          %302 = sbr.rel (%p300) target = $region36
        $region35: #{tpu_custom_call.1} parent=31 // pred_region
          %s303 = smul.u32 2, %s22
          %s305 = ssub.s32 256, 256
          %306 = vsyncadd %s296, %s305
          %s307 = smul.addr %s21, 2
          %s308 = sadd.s32 %s303, %s307
          %s309 = smul.addr %s308, 128
          %s310 = scalar_lea.hbm %s3, %s309
          %s312 = sshll.u32 %s299, 4
          %s313 = int_to_ptr.vmem [resolvable:$true] %s312
          %315 = dma.vmem_to_hbm [thread:$0]  %s313, 256, %s310, %s296
        $region36: #{tpu_custom_call.1} parent=31 // pred_fallthru
          _
      $region32: #{tpu_custom_call.1} parent=5 // pred_fallthru
        _
      %p316 = scmp.le.s32.totalorder 2, %s12
      // Predicated region
      $region37: #{tpu_custom_call.1} parent=5 // pred_check
        %p317 = pneg %p316
      $region38: #{tpu_custom_call.1} parent=5 // pred_check_branch
        %319 = sbr.rel (%p317) target = $region40
      $region39: #{tpu_custom_call.1} parent=5 // pred_region
        %s320 = ssub.s32 %s12, 2
        // Predicated region
        $region41: #{tpu_custom_call.1} parent=39 // pred_check
          %p321 = pneg %p125
        $region42: #{tpu_custom_call.1} parent=39 // pred_check_branch
          %323 = sbr.rel (%p321) target = $region44
        $region43: #{tpu_custom_call.1} parent=39 // pred_region
          %s324 = sand.u32 %s110, 1
          %s325 = scalar_lea.sflag [#allocation3], %s324
          %s326 = sand.u32 %s110, 1
          %s327 = smul.addr %s326, 16
          %s328 = scalar_lea.vmem [#allocation2], %s327
          %329 = dma.done %s325, 256
        $region44: #{tpu_custom_call.1} parent=39 // pred_fallthru
          _
      $region40: #{tpu_custom_call.1} parent=5 // pred_fallthru
        _
    $region6: #{tpu_custom_call.1} parent=1 // loop_footer
      %s16 = sadd.s32 1, %s12
    $region7: #{tpu_custom_call.1} parent=1 // loop_footer_branch
      %11 = sbr.rel target = $region3
    $region8: #{tpu_custom_call.1} parent=1 // loop_exit
      _
    %330 = vsyncpa [#allocation3], 1
    %s331 = scalar_lea.sflag [#allocation3], 1
    %332 = vsyncpa %s331, 1

</llo_original>
